<compile_context>
chip_gen: v5e
topology: v5e:2x2
jax: 0.10.0
libtpu: 0.0.40
codegen_flags: <defaults>
</compile_context>

<pallas_src>
import functools

import jax
import jax.numpy as jnp
import numpy as np
from jax.experimental import pallas as pl
from jax.experimental.pallas import tpu as pltpu


# --------------------------------------------------------------------------------------
# Kernel
# --------------------------------------------------------------------------------------
def _fourier_loss_kernel(yhat_ref, y_ref, basis_ref, out_ref, d_ref, acc_ref):
    k = pl.program_id(1)

    @pl.when(k == 0)
    def _init():
        # Hoisted per batch block: one VPU subtract + one cast, reused by every frequency step.
        d_ref[...] = (yhat_ref[...] - y_ref[...]).astype(d_ref.dtype)
        acc_ref[...] = jnp.zeros_like(acc_ref)

    # Single MXU matmul against the current [cos | sin] frequency tile (f32 accumulation).
    proj = jnp.dot(d_ref[...], basis_ref[...],
                   preferred_element_type=jnp.float32)           # (tb, tk) f32
    # Per-step work stays sublane-reduce + lane-aligned VPU add (no per-step cross-lane reduce,
    # no per-step masked (1,1) store).
    acc_ref[...] += jnp.sum(proj * proj, axis=0, keepdims=True)  # (1, tk)

    @pl.when(k == pl.num_programs(1) - 1)
    def _finalize():
        # One cross-lane reduce per batch block; partial sum for this batch block.
        partial = jnp.sum(acc_ref[...], axis=1, keepdims=True)   # (1, 1)
        out_ref[...] = partial.reshape(out_ref.shape)            # (1, 1, 1)


# --------------------------------------------------------------------------------------
# Host-side helpers (basis cache, VMEM budgeting, tiling)
# --------------------------------------------------------------------------------------
def _round_up(x, m):
    return ((x + m - 1) // m) * m


@functools.lru_cache(maxsize=8)
def _dft_basis(n, k_pad, dtype_name):
    """Device-resident concatenated DFT basis: columns [0,n)=cos, [n,2n)=sin, rest zero.

    Built once per (n, k_pad, dtype) with jnp ops and cached, so steady-state calls do no host
    transcendental work and no host->HBM upload.
    """
    dtype = jnp.dtype(dtype_name)
    i = jnp.arange(n, dtype=jnp.int32)
    # Exact integer range reduction: (i*k) mod n keeps the angle in [0, 2*pi).
    # Exact for n <= ~46340 (int32 product).  TODO(synk): widen for larger n.
    ik = (i[:, None] * i[None, :]) % n
    ang = ik.astype(jnp.float32) * jnp.float32(2.0 * jnp.pi / n)
    basis = jnp.concatenate([jnp.cos(ang), jnp.sin(ang)], axis=1)       # (n, 2n)
    if k_pad > 2 * n:
        basis = jnp.pad(basis, ((0, 0), (0, k_pad - 2 * n)))            # zero columns: no effect
    return jax.block_until_ready(basis.astype(dtype))


def _vmem_budget_bytes():
    """Usable VMEM budget with headroom; conservative 64 MiB (v7x) default if query fails."""
    cap = 64 * 1024 * 1024
    try:
        cap = int(pltpu.get_tpu_info().vmem_capacity_bytes)
    except Exception:
        pass
    return (3 * cap) // 4


def _choose_tb(b, n, budget, d_itemsize):
    """Batch tile (multiple of 8) small enough that resident input blocks + d scratch fit."""
    b8 = max(8, _round_up(b, 8))
    for tb in (256, 128, 64, 32, 16, 8):
        if tb > b8:
            continue
        resident = 2 * 2 * tb * n * 4 + tb * n * d_itemsize  # yhat+y (double-buffered) + d
        if resident <= budget // 2:
            return tb
    return 8


def _choose_freq_tile(n, block_k, budget, tb, basis_itemsize, d_itemsize):
    """Frequency tile: multiple of 128, VMEM-capped, preferring exact division (no tail tile)."""
    k2_pad128 = _round_up(2 * n, 128)
    fixed = 2 * 2 * tb * n * 4 + tb * n * d_itemsize + 4096
    per_col = 2 * n * basis_itemsize + 8 * 4          # double-buffered basis column + acc scratch
    avail = max(budget - fixed, per_col * 128)
    tk_cap = max(128, (avail // per_col) // 128 * 128)
    block_k = max(128, (int(block_k) // 128) * 128)
    target = min(block_k, tk_cap, k2_pad128)
    m = k2_pad128 // 128
    best = max(d for d in range(1, m + 1) if m % d == 0 and 128 * d <= target)
    tk_exact = 128 * best
    if 2 * tk_exact >= target:
        return tk_exact, k2_pad128                    # exact division: no wasted tail tile
    # Exact division would force tiny tiles; accept a zero-padded tail instead.
    k_pad = _round_up(k2_pad128, target)
    return target, k_pad


# --------------------------------------------------------------------------------------
# Wrapper
# --------------------------------------------------------------------------------------
def fourier_loss(yhat, y, *, block_k=2048, basis_dtype=jnp.bfloat16):
    """Pallas implementation of FourrierLoss.forward(yHat, y) for (B, N) inputs."""
    assert yhat.shape == y.shape and yhat.ndim == 2
    b, n = yhat.shape
    basis_dtype = jnp.dtype(basis_dtype)
    budget = _vmem_budget_bytes()

    tb = _choose_tb(b, n, budget, basis_dtype.itemsize)
    b_pad = _round_up(b, tb)
    tk, k_pad = _choose_freq_tile(n, block_k, budget, tb,
                                  basis_dtype.itemsize, basis_dtype.itemsize)
    num_b = b_pad // tb
    num_k = k_pad // tk

    basis = _dft_basis(n, k_pad, basis_dtype.name)    # cached on device across calls

    yhat32 = yhat.astype(jnp.float32)
    y32 = y.astype(jnp.float32)
    if b_pad != b:
        # Zero padding: padded rows have d == 0, contributing nothing to the sum.
        yhat32 = jnp.pad(yhat32, ((0, b_pad - b), (0, 0)))
        y32 = jnp.pad(y32, ((0, b_pad - b), (0, 0)))

    partials = pl.pallas_call(
        _fourier_loss_kernel,
        out_shape=jax.ShapeDtypeStruct((num_b, 1, 1), jnp.float32),
        grid_spec=pltpu.PrefetchScalarGridSpec(
            num_scalar_prefetch=0,
            grid=(num_b, num_k),                      # batch (parallel), frequency (reduction)
            in_specs=[
                pl.BlockSpec((tb, n), lambda bi, ki: (bi, 0)),   # yHat (DMA once per batch blk)
                pl.BlockSpec((tb, n), lambda bi, ki: (bi, 0)),   # y    (DMA once per batch blk)
                pl.BlockSpec((n, tk), lambda bi, ki: (0, ki)),   # basis tile streamed over freq
            ],
            out_specs=pl.BlockSpec((1, 1, 1), lambda bi, ki: (bi, 0, 0)),  # per-batch-blk partial
            scratch_shapes=[
                pltpu.VMEM((tb, n), basis_dtype),     # hoisted difference d (cast once)
                pltpu.VMEM((1, tk), jnp.float32),     # lane-aligned column-sum accumulator
            ],
        ),
        compiler_params=pltpu.CompilerParams(
            dimension_semantics=("parallel", "arbitrary"),
            vmem_limit_bytes=int(budget),
        ),
    )(yhat32, y32, basis)

    # MSE normalization applied once, after summing the per-batch-block partials.
    return jnp.sum(partials) * jnp.float32(1.0 / (2 * b * n))


def _reference_loss(yhat, y):
    """Pure-JAX reference matching torch.rfft(x, 1, onesided=False) + MSELoss."""
    fh = jnp.fft.fft(yhat.astype(jnp.float32), axis=-1)
    fy = jnp.fft.fft(y.astype(jnp.float32), axis=-1)
    dh = jnp.stack([jnp.real(fh), jnp.imag(fh)], axis=-1).reshape(-1)
    dy = jnp.stack([jnp.real(fy), jnp.imag(fy)], axis=-1).reshape(-1)
    return jnp.mean((dh - dy) ** 2)


# TODO(synk): FourrierLoss.getS calls self.computeSmoothness, which is not defined in the
# original source and is unused by forward(); it is not translated.

if __name__ == "__main__":
    key = jax.random.PRNGKey(0)
    k1, k2 = jax.random.split(key)
    B, N = 8, 128  # batch of signals, FFT axis = last dim
    yhat = jax.random.normal(k1, (B, N), dtype=jnp.float32)
    y = jax.random.normal(k2, (B, N), dtype=jnp.float32)

    ref = _reference_loss(yhat, y)

    # f32-basis path with a small tile (grid=(1, 2)) to exercise the multi-step reduction path;
    # tight tolerance.
    loss_f32 = fourier_loss(yhat, y, block_k=128, basis_dtype=jnp.float32)
    jax.block_until_ready(loss_f32)
    np.testing.assert_allclose(np.asarray(loss_f32), np.asarray(ref), rtol=1e-3, atol=1e-3)

    # Default (bf16 basis + bf16 difference, f32 accumulation) HBM-optimized path; bf16
    # quantization of cos/sin and of d warrants a looser tolerance.
    loss_bf16 = fourier_loss(yhat, y)
    jax.block_until_ready(loss_bf16)
    np.testing.assert_allclose(np.asarray(loss_bf16), np.asarray(ref), rtol=2e-2, atol=2e-2)

    print("KERNEL_OK")
</pallas_src>

<mosaic_0001>
module attributes {stable_mosaic.version = 11 : i64} {
  func.func @_fourier_loss_kernel(%arg0: i32, %arg1: i32, %arg2: memref<8x128xf32, #tpu.memory_space<vmem>>, %arg3: memref<8x128xf32, #tpu.memory_space<vmem>>, %arg4: memref<128x128xf32, #tpu.memory_space<vmem>>, %arg5: memref<1x1x1xf32, #tpu.memory_space<vmem>>, %arg6: memref<8x128xf32, #tpu.memory_space<vmem>>, %arg7: memref<1x128xf32, #tpu.memory_space<vmem>>) attributes {dimension_semantics = [#tpu.dimension_semantics<parallel>, #tpu.dimension_semantics<arbitrary>], iteration_bounds = array<i64: 1, 2>, scalar_prefetch = 0 : i64, scratch_operands = 2 : i64, tpu.core_type = #tpu.core_type<tc>, window_params = [{transform_indices = @transform_0, window_bounds = array<i64: 8, 128>}, {transform_indices = @transform_1, window_bounds = array<i64: 8, 128>}, {transform_indices = @transform_2, window_bounds = array<i64: 128, 128>}, {transform_indices = @transform_3, window_bounds = array<i64: 1, 1, 1>}]} {
    %c0_i32 = arith.constant 0 : i32
    %0 = arith.cmpi eq, %arg1, %c0_i32 : i32
    %1 = arith.extui %0 : i1 to i32
    %c0_i32_0 = arith.constant 0 : i32
    %2 = arith.cmpi ne, %1, %c0_i32_0 : i32
    scf.if %2 {
      %c0_10 = arith.constant 0 : index
      %c0_11 = arith.constant 0 : index
      %15 = vector.load %arg2[%c0_10, %c0_11] : memref<8x128xf32, #tpu.memory_space<vmem>>, vector<8x128xf32>
      %c0_12 = arith.constant 0 : index
      %c0_13 = arith.constant 0 : index
      %16 = vector.load %arg3[%c0_12, %c0_13] : memref<8x128xf32, #tpu.memory_space<vmem>>, vector<8x128xf32>
      %17 = arith.subf %15, %16 : vector<8x128xf32>
      %c0_14 = arith.constant 0 : index
      %c0_15 = arith.constant 0 : index
      %18 = vector.load %arg6[%c0_14, %c0_15] : memref<8x128xf32, #tpu.memory_space<vmem>>, vector<8x128xf32>
      tpu.vector_store %arg6[%c0_14, %c0_15], %17 {strides = array<i32>} : memref<8x128xf32, #tpu.memory_space<vmem>>, vector<8x128xf32>,
      %cst_16 = arith.constant 0.000000e+00 : f32
      %19 = vector.broadcast %cst_16 : f32 to vector<1x128xf32>
      %c0_17 = arith.constant 0 : index
      %c0_18 = arith.constant 0 : index
      %20 = vector.load %arg7[%c0_17, %c0_18] : memref<1x128xf32, #tpu.memory_space<vmem>>, vector<1x128xf32>
      tpu.vector_store %arg7[%c0_17, %c0_18], %19 {strides = array<i32>} : memref<1x128xf32, #tpu.memory_space<vmem>>, vector<1x128xf32>,
    } else {
    }
    %c0 = arith.constant 0 : index
    %c0_1 = arith.constant 0 : index
    %3 = vector.load %arg6[%c0, %c0_1] : memref<8x128xf32, #tpu.memory_space<vmem>>, vector<8x128xf32>
    %c0_2 = arith.constant 0 : index
    %c0_3 = arith.constant 0 : index
    %4 = vector.load %arg4[%c0_2, %c0_3] : memref<128x128xf32, #tpu.memory_space<vmem>>, vector<128x128xf32>
    %cst = arith.constant dense<0.000000e+00> : vector<8x128xf32>
    %5 = tpu.matmul %3, %4, %cst {dimension_numbers = #tpu.dot_dimension_numbers<[1], [0], [0], [1], [0, 0, 1, 1], [], []>} : vector<8x128xf32>, vector<128x128xf32>, vector<8x128xf32> -> vector<8x128xf32>
    %c0_4 = arith.constant 0 : index
    %c0_5 = arith.constant 0 : index
    %6 = vector.load %arg7[%c0_4, %c0_5] : memref<1x128xf32, #tpu.memory_space<vmem>>, vector<1x128xf32>
    %7 = arith.mulf %5, %5 : vector<8x128xf32>
    %cst_6 = arith.constant dense<0.000000e+00> : vector<128xf32>
    %8 = vector.multi_reduction <add>, %7, %cst_6 [0] : vector<8x128xf32> to vector<128xf32>
    %9 = vector.shape_cast %8 : vector<128xf32> to vector<1x128xf32>
    %10 = arith.addf %6, %9 : vector<1x128xf32>
    %c0_7 = arith.constant 0 : index
    %c0_8 = arith.constant 0 : index
    %11 = vector.load %arg7[%c0_7, %c0_8] : memref<1x128xf32, #tpu.memory_space<vmem>>, vector<1x128xf32>
    tpu.vector_store %arg7[%c0_7, %c0_8], %10 {strides = array<i32>} : memref<1x128xf32, #tpu.memory_space<vmem>>, vector<1x128xf32>,
    %c1_i32 = arith.constant 1 : i32
    %12 = arith.cmpi eq, %arg1, %c1_i32 : i32
    %13 = arith.extui %12 : i1 to i32
    %c0_i32_9 = arith.constant 0 : i32
    %14 = arith.cmpi ne, %13, %c0_i32_9 : i32
    scf.if %14 {
      %c0_10 = arith.constant 0 : index
      %c0_11 = arith.constant 0 : index
      %15 = vector.load %arg7[%c0_10, %c0_11] : memref<1x128xf32, #tpu.memory_space<vmem>>, vector<1x128xf32>
      %cst_12 = arith.constant dense<0.000000e+00> : vector<1xf32>
      %16 = vector.multi_reduction <add>, %15, %cst_12 [1] : vector<1x128xf32> to vector<1xf32>
      %17 = vector.shape_cast %16 : vector<1xf32> to vector<1x1xf32>
      %18 = vector.shape_cast %17 : vector<1x1xf32> to vector<1x1x1xf32>
      %c0_13 = arith.constant 0 : index
      %c0_14 = arith.constant 0 : index
      %c0_15 = arith.constant 0 : index
      %19 = vector.load %arg5[%c0_13, %c0_14, %c0_15] : memref<1x1x1xf32, #tpu.memory_space<vmem>>, vector<1x1x1xf32>
      tpu.vector_store %arg5[%c0_13, %c0_14, %c0_15], %18 {strides = array<i32>} : memref<1x1x1xf32, #tpu.memory_space<vmem>>, vector<1x1x1xf32>,
    } else {
    }
    return
  }
  func.func @transform_0(%arg0: i32, %arg1: i32) -> (i32, i32) {
    %c0_i32 = arith.constant 0 : i32
    %c0_i32_0 = arith.constant 0 : i32
    return %arg0, %c0_i32 : i32, i32
  }
  func.func @transform_1(%arg0: i32, %arg1: i32) -> (i32, i32) {
    %c0_i32 = arith.constant 0 : i32
    %c0_i32_0 = arith.constant 0 : i32
    return %arg0, %c0_i32 : i32, i32
  }
  func.func @transform_2(%arg0: i32, %arg1: i32) -> (i32, i32) {
    %c0_i32 = arith.constant 0 : i32
    %c0_i32_0 = arith.constant 0 : i32
    return %c0_i32, %arg1 : i32, i32
  }
  func.func @transform_3(%arg0: i32, %arg1: i32) -> (i32, i32, i32) {
    %c0_i32 = arith.constant 0 : i32
    %c0_i32_0 = arith.constant 0 : i32
    %c0_i32_1 = arith.constant 0 : i32
    return %arg0, %c0_i32, %c0_i32_0 : i32, i32, i32
  }
}

</mosaic_0001>

<llo_original>
// kernel: tpu_custom_call.1
$region0: #{tpu_custom_call.1}
  #allocation0 [shape = 'u32[]', space=smem, size = 0x4, offset = 0x4, fixed_abs, tag = 'smem constant byte address 0x4 - core index']
  #allocation1 [shape = 'u32[72,128]{1,0:T(1,128)}', space=vmem, size = 0x9000, scoped, tag = 'internal scratch']
  #allocation2 [shape = 'f32[8,128]{1,0:T(8,128)}', space=vmem, size = 0x1000, scoped, tag = 'scratch operand']
  #allocation3 [shape = 'f32[1,128]{1,0:T(1,128)}', space=vmem, size = 0x200, scoped, tag = 'scratch operand']
  %s0 = inlined_call_operand.hbm [shape: f32[8,128], index: 0, kind: input, shape index: {}]
  %s1 = inlined_call_operand.hbm [shape: f32[8,128], index: 1, kind: input, shape index: {}]
  %s2 = inlined_call_operand.hbm [shape: f32[128,256], index: 2, kind: input, shape index: {}]
  %s3 = inlined_call_operand.hbm [shape: f32[1,1,1], index: 3, kind: output, shape index: {}]
  %s4 = sld [smem:[#allocation0]]
  $region65: #{tpu_custom_call.1} parent=0
    _
  %s6 = ssub.s32 1, %s4
  %s7 = scalar_select 0, %s6, %s4
  $region1: #{tpu_custom_call.1} parent=0
    #allocation4 [shape = 'u8[4096]{0}', space=vmem, size = 0x1000, scoped, tag = 'input window, operand 0, single buffered']
    #allocation5 [shape = 's32[2]{0}', space=sflag, size = 0x8, scoped, tag = 'scoped memory for tpu_custom_call.1']
    #allocation6 [shape = 's32[2]{0}', space=sflag, size = 0x8, scoped, tag = 'scoped memory for tpu_custom_call.1']
    #allocation7 [shape = 'u8[4096]{0}', space=vmem, size = 0x1000, scoped, tag = 'input window, operand 1, single buffered']
    #allocation8 [shape = 's32[1]{0}', space=sflag, size = 0x4, scoped, tag = 'scoped memory for tpu_custom_call.1']
    #allocation9 [shape = 'u8[131072]{0}', space=vmem, size = 0x20000, scoped, tag = 'input window, operand 2']
    #allocation10 [shape = 'u8[512]{0}', space=vmem, size = 0x400, scoped, tag = 'output window, operand 0, single buffered']
    %8 = vsyncpa [#allocation5], 0
    %9 = vsyncpa [#allocation8], 0
    %10 = vsyncpa [#allocation6], 0
    loop: start=0, step=1, limit=4
    $region2: #{tpu_custom_call.1} parent=1 // loop_pre_header
      _
    $region3: #{tpu_custom_call.1} parent=1 // loop_header
      %s12 = sphi 0, %s16
      %p13 = scmp.ge.s32.totalorder %s12, 4
      %s19 = sphi 0, %s31
      %s20 = sphi 0, %s27
      %s21 = sphi 0, %s19
      %s22 = sphi 0, %s20
      %s23 = sphi 0, %s21
      %s24 = sphi 0, %s22
      %s34 = sphi 0, %s36
      %s37 = sphi 0, %s34
      %s38 = sphi 0, %s37
      %s54 = sphi 0, %s38
      %s60 = sphi 0, %s62
      %s63 = sphi 0, %s60
      %s64 = sphi 0, %s63
      %s80 = sphi 0, %s64
      %s86 = sphi 0, %s88
      %s89 = sphi 0, %s86
      %s90 = sphi 0, %s89
      %s106 = sphi 0, %s90
      %s112 = sphi 0, %s114
      %s115 = sphi 0, %s112
      %s116 = sphi 0, %s115
      %s132 = sphi 0, %s116
    $region4: #{tpu_custom_call.1} parent=1 // loop_header_branch
      %15 = sbr.rel (%p13) target = $region8
    $region5: #{tpu_custom_call.1} parent=1 // loop_body
      %s17 = ssub.s32 %s12, 1
      %s18 = ssub.s32 %s12, 2
      %s25 = sadd.s32 1, %s20
      %p26 = scmp.ge.s32.totalorder %s25, 2
      %s27 = scalar_select %p26, 0, %s25
      %s28 = sadd.s32 1, %s19
      %s29 = scalar_select %p26, %s28, %s19
      %p30 = scmp.ge.s32.totalorder %s29, 1
      %s31 = scalar_select %p30, 0, %s29
      %s32 = ssub.s32 %s19, %s31
      %p33 = scmp.eq.s32.totalorder %s32, 0
      %s35 = sadd.s32 %s34, 1
      %s36 = scalar_select %p33, %s34, %s35
      %p39 = pneg %p33
      %p40 = scmp.eq.s32.totalorder %s12, 1
      %p41 = por %p39, %p40
      %p42 = scmp.ne.s32.totalorder %s34, %s37
      %p43 = scmp.eq.s32.totalorder %s12, 0
      %p44 = por %p42, %p43
      %p45 = scmp.ne.s32.totalorder %s34, %s37
      %p46 = scmp.eq.s32.totalorder %s17, 1
      %p47 = por %p45, %p46
      %p48 = scmp.ne.s32.totalorder %s37, %s38
      %p49 = scmp.eq.s32.totalorder %s17, 0
      %p50 = por %p48, %p49
      %p51 = scmp.ne.s32.totalorder %s37, %s38
      %p52 = scmp.eq.s32.totalorder %s18, 1
      %p53 = por %p51, %p52
      %p55 = scmp.ne.s32.totalorder %s38, %s54
      %p56 = scmp.eq.s32.totalorder %s18, 0
      %p57 = por %p55, %p56
      %s58 = ssub.s32 %s19, %s31
      %p59 = scmp.eq.s32.totalorder %s58, 0
      %s61 = sadd.s32 %s60, 1
      %s62 = scalar_select %p59, %s60, %s61
      %p65 = pneg %p59
      %p66 = scmp.eq.s32.totalorder %s12, 1
      %p67 = por %p65, %p66
      %p68 = scmp.ne.s32.totalorder %s60, %s63
      %p69 = scmp.eq.s32.totalorder %s12, 0
      %p70 = por %p68, %p69
      %p71 = scmp.ne.s32.totalorder %s60, %s63
      %p72 = scmp.eq.s32.totalorder %s17, 1
      %p73 = por %p71, %p72
      %p74 = scmp.ne.s32.totalorder %s63, %s64
      %p75 = scmp.eq.s32.totalorder %s17, 0
      %p76 = por %p74, %p75
      %p77 = scmp.ne.s32.totalorder %s63, %s64
      %p78 = scmp.eq.s32.totalorder %s18, 1
      %p79 = por %p77, %p78
      %p81 = scmp.ne.s32.totalorder %s64, %s80
      %p82 = scmp.eq.s32.totalorder %s18, 0
      %p83 = por %p81, %p82
      %s84 = ssub.s32 %s20, %s27
      %p85 = scmp.eq.s32.totalorder %s84, 0
      %s87 = sadd.s32 %s86, 1
      %s88 = scalar_select %p85, %s86, %s87
      %p91 = pneg %p85
      %p92 = scmp.eq.s32.totalorder %s12, 1
      %p93 = por %p91, %p92
      %p94 = scmp.ne.s32.totalorder %s86, %s89
      %p95 = scmp.eq.s32.totalorder %s12, 0
      %p96 = por %p94, %p95
      %p97 = scmp.ne.s32.totalorder %s86, %s89
      %p98 = scmp.eq.s32.totalorder %s17, 1
      %p99 = por %p97, %p98
      %p100 = scmp.ne.s32.totalorder %s89, %s90
      %p101 = scmp.eq.s32.totalorder %s17, 0
      %p102 = por %p100, %p101
      %p103 = scmp.ne.s32.totalorder %s89, %s90
      %p104 = scmp.eq.s32.totalorder %s18, 1
      %p105 = por %p103, %p104
      %p107 = scmp.ne.s32.totalorder %s90, %s106
      %p108 = scmp.eq.s32.totalorder %s18, 0
      %p109 = por %p107, %p108
      %s110 = ssub.s32 %s19, %s31
      %p111 = scmp.eq.s32.totalorder %s110, 0
      %s113 = sadd.s32 %s112, 1
      %s114 = scalar_select %p111, %s112, %s113
      %p117 = pneg %p111
      %p118 = scmp.eq.s32.totalorder %s12, 1
      %p119 = por %p117, %p118
      %p120 = scmp.ne.s32.totalorder %s112, %s115
      %p121 = scmp.eq.s32.totalorder %s12, 0
      %p122 = por %p120, %p121
      %p123 = scmp.ne.s32.totalorder %s112, %s115
      %p124 = scmp.eq.s32.totalorder %s17, 1
      %p125 = por %p123, %p124
      %p126 = scmp.ne.s32.totalorder %s115, %s116
      %p127 = scmp.eq.s32.totalorder %s17, 0
      %p128 = por %p126, %p127
      %p129 = scmp.ne.s32.totalorder %s115, %s116
      %p130 = scmp.eq.s32.totalorder %s18, 1
      %p131 = por %p129, %p130
      %p133 = scmp.ne.s32.totalorder %s116, %s132
      %p134 = scmp.eq.s32.totalorder %s18, 0
      %p135 = por %p133, %p134
      %p136 = scmp.le.s32.totalorder 1, %s12
      %p137 = scmp.lt.s32.totalorder %s12, 3
      %p138 = pnand %p136, %p137
      %p139 = pneg %p138
      // Predicated region
      $region9: #{tpu_custom_call.1} parent=5 // pred_check
        _
      $region10: #{tpu_custom_call.1} parent=5 // pred_check_branch
        %141 = sbr.rel (%p138) target = $region12
      $region11: #{tpu_custom_call.1} parent=5 // pred_region
        %s142 = ssub.s32 %s12, 1
        // Predicated region
        $region13: #{tpu_custom_call.1} parent=11 // pred_check
          %p143 = pneg %p50
        $region14: #{tpu_custom_call.1} parent=11 // pred_check_branch
          %145 = sbr.rel (%p143) target = $region16
        $region15: #{tpu_custom_call.1} parent=11 // pred_region
          %147 = vsyncadd [#allocation5], 0
          %s148 = smul.addr %s21, 8
          %s149 = scalar_lea.hbm %s0, %s148
          %s151 = sshll.u32 %s149, 4
          %s152 = int_to_ptr.hbm [resolvable:$true] %s151
          %s153 = sshll.u32 [#allocation4], 4
          %s154 = int_to_ptr.vmem [resolvable:$true] %s153
          %156 = dma.hbm_to_vmem [thread:$0]  %s152, 128, %s154, [#allocation5]
        $region16: #{tpu_custom_call.1} parent=11 // pred_fallthru
          _
        // Predicated region
        $region17: #{tpu_custom_call.1} parent=11 // pred_check
          %p157 = pneg %p76
        $region18: #{tpu_custom_call.1} parent=11 // pred_check_branch
          %159 = sbr.rel (%p157) target = $region20
        $region19: #{tpu_custom_call.1} parent=11 // pred_region
          %161 = vsyncadd [#allocation8], 0
          %s162 = smul.addr %s21, 8
          %s163 = scalar_lea.hbm %s1, %s162
          %s165 = sshll.u32 %s163, 4
          %s166 = int_to_ptr.hbm [resolvable:$true] %s165
          %s167 = sshll.u32 [#allocation7], 4
          %s168 = int_to_ptr.vmem [resolvable:$true] %s167
          %170 = dma.hbm_to_vmem [thread:$0]  %s166, 128, %s168, [#allocation8]
        $region20: #{tpu_custom_call.1} parent=11 // pred_fallthru
          _
      $region12: #{tpu_custom_call.1} parent=5 // pred_fallthru
        _
      %p171 = scmp.lt.s32.totalorder %s12, 2
      // Predicated region
      $region21: #{tpu_custom_call.1} parent=5 // pred_check
        %p172 = pneg %p171
      $region22: #{tpu_custom_call.1} parent=5 // pred_check_branch
        %174 = sbr.rel (%p172) target = $region24
      $region23: #{tpu_custom_call.1} parent=5 // pred_region
        // Predicated region
        $region25: #{tpu_custom_call.1} parent=23 // pred_check
          %p175 = pneg %p96
        $region26: #{tpu_custom_call.1} parent=23 // pred_check_branch
          %177 = sbr.rel (%p175) target = $region28
        $region27: #{tpu_custom_call.1} parent=23 // pred_region
          %s178 = sand.u32 %s12, 1
          %s179 = scalar_lea.sflag [#allocation5], %s178
          %s180 = sand.u32 %s86, 1
          %s181 = smul.addr %s180, 128
          %s182 = scalar_lea.vmem [#allocation9], %s181
          %184 = vsyncadd %s179, 0
          %s185 = smul.addr %s20, 8
          %s186 = scalar_lea.hbm %s2, %s185
          %s187 = sshll.u32 %s186, 4
          %s188 = int_to_ptr.hbm [resolvable:$true] %s187
          %s189 = sshll.u32 %s182, 4
          %s190 = int_to_ptr.vmem [resolvable:$true] %s189
          %195 = dma.hbm_to_vmem [thread:$0]  %s188, 2048, %s190, %s179, 256, 128, 8
        $region28: #{tpu_custom_call.1} parent=23 // pred_fallthru
          _
      $region24: #{tpu_custom_call.1} parent=5 // pred_fallthru
        _
      %p196 = scmp.le.s32.totalorder 1, %s12
      %p197 = scmp.lt.s32.totalorder %s12, 3
      %p198 = pnand %p196, %p197
      %p199 = pneg %p198
      // Predicated region
      $region29: #{tpu_custom_call.1} parent=5 // pred_check
        _
      $region30: #{tpu_custom_call.1} parent=5 // pred_check_branch
        %201 = sbr.rel (%p198) target = $region32
      $region31: #{tpu_custom_call.1} parent=5 // pred_region
        %s202 = ssub.s32 %s12, 1
        // Predicated region
        $region33: #{tpu_custom_call.1} parent=31 // pred_check
          %p203 = pneg %p50
        $region34: #{tpu_custom_call.1} parent=31 // pred_check_branch
          %205 = sbr.rel (%p203) target = $region36
        $region35: #{tpu_custom_call.1} parent=31 // pred_region
          %207 = dma.done [#allocation5], 128
        $region36: #{tpu_custom_call.1} parent=31 // pred_fallthru
          _
        // Predicated region
        $region37: #{tpu_custom_call.1} parent=31 // pred_check
          %p208 = pneg %p76
        $region38: #{tpu_custom_call.1} parent=31 // pred_check_branch
          %210 = sbr.rel (%p208) target = $region40
        $region39: #{tpu_custom_call.1} parent=31 // pred_region
          %212 = dma.done [#allocation8], 128
        $region40: #{tpu_custom_call.1} parent=31 // pred_fallthru
          _
        %s213 = sand.u32 %s17, 1
        %s214 = scalar_lea.sflag [#allocation5], %s213
        %s215 = sand.u32 %s89, 1
        %s216 = smul.addr %s215, 128
        %s217 = scalar_lea.vmem [#allocation9], %s216
        // Predicated region
        $region41: #{tpu_custom_call.1} parent=31 // pred_check
          %p218 = pneg %p102
        $region42: #{tpu_custom_call.1} parent=31 // pred_check_branch
          %220 = sbr.rel (%p218) target = $region44
        $region43: #{tpu_custom_call.1} parent=31 // pred_region
          %222 = dma.done %s214, 2048
        $region44: #{tpu_custom_call.1} parent=31 // pred_fallthru
          _
        %p223 = pneg %p50
        %p224 = pneg %p47
        %p225 = pneg %p76
        %p226 = pneg %p73
        %s227 = sand.u32 %s17, 1
        %s228 = scalar_lea.sflag [#allocation5], %s227
        %s229 = sand.u32 %s89, 1
        %s230 = smul.addr %s229, 128
        %s231 = scalar_lea.vmem [#allocation9], %s230
        %p232 = pneg %p102
        %p233 = pneg %p99
        %p234 = pneg %p128
        %p235 = pneg %p125
        %p236 = scmp.eq.s32.totalorder %s22, 0
        // Predicated region
        $region45: #{tpu_custom_call.1} parent=31 // pred_check
          %p237 = pneg %p236
        $region46: #{tpu_custom_call.1} parent=31 // pred_check_branch
          %239 = sbr.rel (%p237) target = $region48
        $region47: #{tpu_custom_call.1} parent=31 // pred_region
          %v240 = vld [vmem:[#allocation4] sm:$0xff]
          %v241 = vld [vmem:[#allocation7] sm:$0xff]
          %v242 = vsub.f32 %v240, %v241
          %243 = vst [vmem:[#allocation2] sm:$0xff] %v242
          %244 = vst [vmem:[#allocation3] sm:$0x1] 0.0
        $region48: #{tpu_custom_call.1} parent=31 // pred_fallthru
          _
        %v245 = vld [vmem:[#allocation2] sm:$0xff]
        %v246 = vld [vmem:[%s217] sm:$0xff]
        %v247 = vld [vmem:[%s217 + $0x8] sm:$0xff]
        %v248 = vld [vmem:[%s217 + $0x10] sm:$0xff]
        %v249 = vld [vmem:[%s217 + $0x18] sm:$0xff]
        %v250 = vld [vmem:[%s217 + $0x20] sm:$0xff]
        %v251 = vld [vmem:[%s217 + $0x28] sm:$0xff]
        %v252 = vld [vmem:[%s217 + $0x30] sm:$0xff]
        %v253 = vld [vmem:[%s217 + $0x38] sm:$0xff]
        %v254 = vld [vmem:[%s217 + $0x40] sm:$0xff]
        %v255 = vld [vmem:[%s217 + $0x48] sm:$0xff]
        %v256 = vld [vmem:[%s217 + $0x50] sm:$0xff]
        %v257 = vld [vmem:[%s217 + $0x58] sm:$0xff]
        %v258 = vld [vmem:[%s217 + $0x60] sm:$0xff]
        %v259 = vld [vmem:[%s217 + $0x68] sm:$0xff]
        %v260 = vld [vmem:[%s217 + $0x70] sm:$0xff]
        %v261 = vld [vmem:[%s217 + $0x78] sm:$0xff]
        %262 = vmatpush.msra.mxu0 %v261
        %263 = vmatpush.msra.mxu0 %v260
        %264 = vmatpush.msra.mxu0 %v259
        %265 = vmatpush.msra.mxu0 %v258
        %266 = vmatpush.msra.mxu0 %v257
        %267 = vmatpush.msra.mxu0 %v256
        %268 = vmatpush.msra.mxu0 %v255
        %269 = vmatpush.msra.mxu0 %v254
        %270 = vmatpush.msra.mxu0 %v253
        %271 = vmatpush.msra.mxu0 %v252
        %272 = vmatpush.msra.mxu0 %v251
        %273 = vmatpush.msra.mxu0 %v250
        %274 = vmatpush.msra.mxu0 %v249
        %275 = vmatpush.msra.mxu0 %v248
        %276 = vmatpush.msra.mxu0 %v247
        %277 = vmatpush.msra.mxu0 %v246
        %278 = vmatmul.f32.gmra.mxu0 %v245
        %v279 = vpop.f32.mrf.mxu0
        %v280 = vadd.f32 0.0, %v279
        %281 = vdwg.mxu0
        %v282 = vld [vmem:[#allocation3] sm:$0x1]
        %v283 = vmul.f32 %v280, %v280
        %v284 = vrot.slane %v283, 4
        %v285 = vadd.f32 %v283, %v284
        %v286 = vrot.slane %v285, 2
        %v287 = vadd.f32 %v285, %v286
        %v288 = vrot.slane %v287, 1
        %v289 = vadd.f32 %v287, %v288
        %v290 = vadd.f32 %v282, %v289
        %291 = vst [vmem:[#allocation3] sm:$0x1] %v290
        %p292 = scmp.eq.s32.totalorder %s22, 1
        // Predicated region
        $region49: #{tpu_custom_call.1} parent=31 // pred_check
          %p293 = pneg %p292
        $region50: #{tpu_custom_call.1} parent=31 // pred_check_branch
          %295 = sbr.rel (%p293) target = $region52
        $region51: #{tpu_custom_call.1} parent=31 // pred_region
          %v296 = vld [vmem:[#allocation3] sm:$0x1]
          %vm297 = vcmask 1040384
          %v298 = vsel %vm297, %v296, 0.0
          %299 = vadd.xlane.f32.xlu0 %v298
          %v300 = vpop.xlane.xlu0 %299
          %vm301 = vcmask 0
          %302 = vst.msk [vmem:[#allocation10] sm:$0x1] %vm301, %v300
        $region52: #{tpu_custom_call.1} parent=31 // pred_fallthru
          _
        // Predicated region
        $region53: #{tpu_custom_call.1} parent=31 // pred_check
          %p303 = pneg %p125
        $region54: #{tpu_custom_call.1} parent=31 // pred_check_branch
          %305 = sbr.rel (%p303) target = $region56
        $region55: #{tpu_custom_call.1} parent=31 // pred_region
          %307 = vsyncadd [#allocation6], 0
          %s308 = scalar_lea.hbm %s3, %s21
          %s310 = sshll.u32 [#allocation10], 4
          %s311 = int_to_ptr.vmem [resolvable:$true] %s310
          %s312 = sshll.u32 %s308, 4
          %s313 = int_to_ptr.hbm [resolvable:$true] %s312
          %315 = dma.vmem_to_hbm [thread:$0]  %s311, 16, %s313, [#allocation6]
        $region56: #{tpu_custom_call.1} parent=31 // pred_fallthru
          _
        // Predicated region
        $region57: #{tpu_custom_call.1} parent=31 // pred_check
          %p316 = pneg %p125
        $region58: #{tpu_custom_call.1} parent=31 // pred_check_branch
          %318 = sbr.rel (%p316) target = $region60
        $region59: #{tpu_custom_call.1} parent=31 // pred_region
          %320 = dma.done [#allocation6], 16
        $region60: #{tpu_custom_call.1} parent=31 // pred_fallthru
          _
      $region32: #{tpu_custom_call.1} parent=5 // pred_fallthru
        _
      %p321 = scmp.le.s32.totalorder 2, %s12
      // Predicated region
      $region61: #{tpu_custom_call.1} parent=5 // pred_check
        %p322 = pneg %p321
      $region62: #{tpu_custom_call.1} parent=5 // pred_check_branch
        %324 = sbr.rel (%p322) target = $region64
      $region63: #{tpu_custom_call.1} parent=5 // pred_region
        %s325 = ssub.s32 %s12, 2
      $region64: #{tpu_custom_call.1} parent=5 // pred_fallthru
        _
    $region6: #{tpu_custom_call.1} parent=1 // loop_footer
      %s16 = sadd.s32 1, %s12
    $region7: #{tpu_custom_call.1} parent=1 // loop_footer_branch
      %11 = sbr.rel target = $region3
    $region8: #{tpu_custom_call.1} parent=1 // loop_exit
      _
    %326 = vsyncpa [#allocation5], 1
    %s327 = scalar_lea.sflag [#allocation5], 1
    %328 = vsyncpa %s327, 1
    %329 = vsyncpa [#allocation8], 1
    %330 = vsyncpa [#allocation6], 1
    %s331 = scalar_lea.sflag [#allocation6], 1
    %332 = vsyncpa %s331, 1

</llo_original>
